<compile_context>
chip_gen: v7x
topology: tpu7x:2x2x1
jax: 0.10.0
libtpu: 0.0.40
codegen_flags: <defaults>
</compile_context>

<pallas_src>
import functools

import jax
import jax.numpy as jnp
from jax.experimental import pallas as pl
from jax.experimental.pallas import tpu as pltpu

_LANE = 128
_SUBLANE = 8


def _round_up(n, m):
    return (n + m - 1) // m * m


@functools.lru_cache(maxsize=1)
def _vmem_capacity_bytes():
    """Physical VMEM per TensorCore; conservative v7x default if query fails."""
    try:
        return int(pltpu.get_tpu_info().vmem_capacity_bytes)
    except Exception:
        return 64 * 1024 * 1024


def _fc_relu_kernel(x_ref, w1_ref, b1_ref, w2_ref, b2_ref, w3_ref, b3_ref, o_ref):
    w_dtype = w1_ref.dtype
    # x already arrives in the weight dtype (bf16): no in-kernel cast needed.
    # fc1 + relu1  (MXU matmul, f32 accumulation, f32 bias-add / ReLU, then the
    # activation is immediately re-cast so only the narrow copy stays live).
    h = jnp.dot(x_ref[...], w1_ref[...], preferred_element_type=jnp.float32)
    h = jnp.maximum(h + b1_ref[...], 0.0).astype(w_dtype)
    # fc2 + relu2
    h = jnp.dot(h, w2_ref[...], preferred_element_type=jnp.float32)
    h = jnp.maximum(h + b2_ref[...], 0.0).astype(w_dtype)
    # fc3 + relu3 (stays f32 until the final store cast)
    h = jnp.dot(h, w3_ref[...], preferred_element_type=jnp.float32)
    h = jnp.maximum(h + b3_ref[...], 0.0)
    o_ref[...] = h.astype(o_ref.dtype)


def prepare_params(w1, b1, w2, b2, w3, b3, *, weight_dtype=jnp.bfloat16):
    """One-time pad (to 128-lane multiples) + cast of the FcRelu parameters.

    w* : (in, out) weights (PyTorch Linear stores (out, in) -- pass the transpose).
    b* : (out,) or (1, out) biases.
    weight_dtype: jnp.bfloat16 for full MXU throughput; use jnp.float32 if exact
                  f32 parity with the PyTorch module is required.
    Returns the padded params tuple to feed directly to fc_relu.
    """
    def pad_w(w):
        fin, fout = w.shape
        return jnp.pad(w, ((0, _round_up(fin, _LANE) - fin),
                           (0, _round_up(fout, _LANE) - fout))).astype(weight_dtype)

    def pad_b(b):
        b = b.reshape(1, -1).astype(jnp.float32)  # bias-add/ReLU stay in f32
        fout = b.shape[1]
        return jnp.pad(b, ((0, 0), (0, _round_up(fout, _LANE) - fout)))

    return (pad_w(w1), pad_b(b1), pad_w(w2), pad_b(b2), pad_w(w3), pad_b(b3))


@functools.partial(jax.jit,
                   static_argnames=("out_features", "block_b", "out_dtype",
                                    "return_padded"))
def fc_relu(x, w1p, b1p, w2p, b2p, w3p, b3p, *, out_features=None, block_b=256,
            out_dtype=None, return_padded=False):
    """Fused 3x(Linear + ReLU) on pre-padded params from prepare_params().

    x            : (B, in_features)
    out_features : true (unpadded) output width, used to strip lane padding.
    out_dtype    : set to jnp.bfloat16 to halve output writeback bytes when the
                   consumer accepts it (defaults to x.dtype).
    return_padded: skip the post-kernel slice and return the (B, F3_padded) buffer.
    """
    B, Fin = x.shape
    Fin_p = w1p.shape[0]
    F1_p, F2_p, F3_p = w1p.shape[1], w2p.shape[1], w3p.shape[1]
    weight_dtype = w1p.dtype
    out_dtype = x.dtype if out_dtype is None else out_dtype

    # ---- stream x in the weight dtype (bf16): half the HBM read bytes --------
    xp = jnp.pad(x, ((0, 0), (0, Fin_p - Fin))).astype(weight_dtype)

    # ---- batch tile: 8-aligned, clamped to batch, prefer >= 2 grid steps -----
    B8 = _round_up(B, _SUBLANE)
    bb = max(_SUBLANE, min(_round_up(block_b, _SUBLANE), B8))
    if bb >= B8 and B8 >= 2 * _SUBLANE:
        # >= 2 steps lets the "parallel" batch axis be sharded across TensorCores.
        bb = max(_SUBLANE, _round_up(pl.cdiv(B8, 2), _SUBLANE))

    # ---- VMEM budget derived from the actual chip (not a hardcoded cap) ------
    vmem_limit = int(0.85 * _vmem_capacity_bytes())
    wd_bytes = jnp.dtype(weight_dtype).itemsize
    out_bytes = jnp.dtype(out_dtype).itemsize
    resident = sum(int(a.size) * a.dtype.itemsize
                   for a in (w1p, b1p, w2p, b2p, w3p, b3p))

    def footprint(bb_):
        streamed = 2 * bb_ * (Fin_p * wd_bytes + F3_p * out_bytes)  # double-buffered
        interm = bb_ * (F1_p + F2_p + F3_p) * (4 + wd_bytes)        # f32 + cast copies
        return 2 * resident + streamed + interm                     # weights counted 2x

    # Shrink the batch tile until the working set fits (v7x 64 MiB fallback).
    while footprint(bb) > vmem_limit and bb > _SUBLANE:
        bb = max(_SUBLANE, _round_up(bb // 2, _SUBLANE))
    # TODO(synk): if even bb == 8 cannot fit (very wide layers on v7x), tile the
    # fc2/fc3 output-feature axis with a second grid axis instead of keeping all
    # three weight matrices fully resident.

    grid = (pl.cdiv(B, bb),)

    # ---- advisory cost estimate for XLA scheduling ---------------------------
    flops = 2 * B * (Fin_p * F1_p + F1_p * F2_p + F2_p * F3_p)
    bytes_accessed = (int(xp.size) * wd_bytes + resident + B * F3_p * out_bytes)
    cost = pl.CostEstimate(flops=int(flops), transcendentals=0,
                           bytes_accessed=int(bytes_accessed))

    # NOTE: when B % bb != 0 the last x block reads past B rows; Pallas masks the
    # output writeback so valid rows are unaffected (garbage rows are discarded).
    out_padded = pl.pallas_call(
        _fc_relu_kernel,
        out_shape=jax.ShapeDtypeStruct((B, F3_p), out_dtype),
        grid_spec=pltpu.PrefetchScalarGridSpec(
            num_scalar_prefetch=0,
            grid=grid,
            in_specs=[
                pl.BlockSpec((bb, Fin_p), lambda i: (i, 0)),   # x tile (bf16)
                pl.BlockSpec(w1p.shape, lambda i: (0, 0)),     # resident weights/biases
                pl.BlockSpec(b1p.shape, lambda i: (0, 0)),
                pl.BlockSpec(w2p.shape, lambda i: (0, 0)),
                pl.BlockSpec(b2p.shape, lambda i: (0, 0)),
                pl.BlockSpec(w3p.shape, lambda i: (0, 0)),
                pl.BlockSpec(b3p.shape, lambda i: (0, 0)),
            ],
            out_specs=pl.BlockSpec((bb, F3_p), lambda i: (i, 0)),  # lane-dense out
        ),
        compiler_params=pltpu.CompilerParams(
            dimension_semantics=("parallel",),
            vmem_limit_bytes=vmem_limit,
        ),
        cost_estimate=cost,
    )(xp, w1p, b1p, w2p, b2p, w3p, b3p)

    if return_padded or out_features is None or out_features == F3_p:
        return out_padded                      # no extra HBM pass when lane-aligned
    return out_padded[:, :out_features]


def init_params(key, in_features, out_features, dtype=jnp.float32):
    """Deterministic init matching FcRelu's parameter shapes.

    fc1: in->in, fc2: in->out, fc3: out->out. PyTorch Linear stores weight as
    (out, in); here we build the transposed (in, out) layout used by the kernel.
    """
    ks = jax.random.split(key, 6)

    def lin(kw, kb, fin, fout):
        bound = 1.0 / jnp.sqrt(fin)
        w = jax.random.uniform(kw, (fin, fout), dtype, -bound, bound)
        b = jax.random.uniform(kb, (fout,), dtype, -bound, bound)
        return w, b

    w1, b1 = lin(ks[0], ks[1], in_features, in_features)
    w2, b2 = lin(ks[2], ks[3], in_features, out_features)
    w3, b3 = lin(ks[4], ks[5], out_features, out_features)
    return w1, b1, w2, b2, w3, b3


if __name__ == "__main__":
    key = jax.random.PRNGKey(0)
    kx, kp = jax.random.split(key)

    batch = 8
    in_features = 32
    out_features = 64

    x = jax.random.normal(kx, (batch, in_features), dtype=jnp.float32)
    raw = init_params(kp, in_features, out_features)        # f32, (in, out) layout
    params = prepare_params(*raw)                            # one-time pad + bf16 cast

    out = fc_relu(x, *params, out_features=out_features)     # tile auto-clamps to batch
    out = jax.block_until_ready(out)

    # Pure-JAX reference mirroring the kernel's numerics (bf16 MXU operands,
    # f32 accumulation, f32 bias-add / ReLU, bf16 re-cast between layers).
    # NOTE: bf16 weights deviate from a true f32 PyTorch FcRelu by bf16 rounding;
    # pass weight_dtype=jnp.float32 to prepare_params if f32 parity is required.
    w1, b1, w2, b2, w3, b3 = raw
    h = x.astype(jnp.bfloat16)
    for layer, (w, b) in enumerate(((w1, b1), (w2, b2), (w3, b3))):
        h = jnp.dot(h, w.astype(jnp.bfloat16), preferred_element_type=jnp.float32)
        h = jnp.maximum(h + b.astype(jnp.float32).reshape(1, -1), 0.0)
        if layer < 2:
            h = h.astype(jnp.bfloat16)
    ref = h

    assert out.shape == (batch, out_features), out.shape
    assert jnp.allclose(out, ref, atol=1e-2, rtol=1e-2)

    print("KERNEL_OK")
</pallas_src>

<mosaic_0001>
module attributes {stable_mosaic.version = 11 : i64} {
  func.func @_fc_relu_kernel(%arg0: i32, %arg1: memref<8x128xbf16, #tpu.memory_space<vmem>>, %arg2: memref<128x128xbf16, #tpu.memory_space<vmem>>, %arg3: memref<1x128xf32, #tpu.memory_space<vmem>>, %arg4: memref<128x128xbf16, #tpu.memory_space<vmem>>, %arg5: memref<1x128xf32, #tpu.memory_space<vmem>>, %arg6: memref<128x128xbf16, #tpu.memory_space<vmem>>, %arg7: memref<1x128xf32, #tpu.memory_space<vmem>>, %arg8: memref<8x128xf32, #tpu.memory_space<vmem>>) attributes {dimension_semantics = [#tpu.dimension_semantics<parallel>], iteration_bounds = array<i64: 1>, scalar_prefetch = 0 : i64, scratch_operands = 0 : i64, tpu.core_type = #tpu.core_type<tc>, window_params = [{transform_indices = @transform_0, window_bounds = array<i64: 8, 128>}, {pipeline_mode = #tpu.pipeline_mode<synchronous>, transform_indices = @transform_1, window_bounds = array<i64: 128, 128>}, {pipeline_mode = #tpu.pipeline_mode<synchronous>, transform_indices = @transform_2, window_bounds = array<i64: 1, 128>}, {pipeline_mode = #tpu.pipeline_mode<synchronous>, transform_indices = @transform_3, window_bounds = array<i64: 128, 128>}, {pipeline_mode = #tpu.pipeline_mode<synchronous>, transform_indices = @transform_4, window_bounds = array<i64: 1, 128>}, {pipeline_mode = #tpu.pipeline_mode<synchronous>, transform_indices = @transform_5, window_bounds = array<i64: 128, 128>}, {pipeline_mode = #tpu.pipeline_mode<synchronous>, transform_indices = @transform_6, window_bounds = array<i64: 1, 128>}, {transform_indices = @transform_7, window_bounds = array<i64: 8, 128>}]} {
    %c0 = arith.constant 0 : index
    %c0_0 = arith.constant 0 : index
    %0 = vector.load %arg1[%c0, %c0_0] : memref<8x128xbf16, #tpu.memory_space<vmem>>, vector<8x128xbf16>
    %c0_1 = arith.constant 0 : index
    %c0_2 = arith.constant 0 : index
    %1 = vector.load %arg2[%c0_1, %c0_2] : memref<128x128xbf16, #tpu.memory_space<vmem>>, vector<128x128xbf16>
    %cst = arith.constant dense<0.000000e+00> : vector<8x128xf32>
    %2 = tpu.matmul %0, %1, %cst {dimension_numbers = #tpu.dot_dimension_numbers<[1], [0], [0], [1], [0, 0, 1, 1], [], []>} : vector<8x128xbf16>, vector<128x128xbf16>, vector<8x128xf32> -> vector<8x128xf32>
    %c0_3 = arith.constant 0 : index
    %c0_4 = arith.constant 0 : index
    %3 = vector.load %arg3[%c0_3, %c0_4] : memref<1x128xf32, #tpu.memory_space<vmem>>, vector<1x128xf32>
    %4 = vector.broadcast %3 : vector<1x128xf32> to vector<8x128xf32>
    %5 = arith.addf %2, %4 : vector<8x128xf32>
    %cst_5 = arith.constant 0.000000e+00 : f32
    %6 = vector.broadcast %cst_5 : f32 to vector<8x128xf32>
    %7 = arith.maximumf %5, %6 : vector<8x128xf32>
    %8 = arith.truncf %7 : vector<8x128xf32> to vector<8x128xbf16>
    %c0_6 = arith.constant 0 : index
    %c0_7 = arith.constant 0 : index
    %9 = vector.load %arg4[%c0_6, %c0_7] : memref<128x128xbf16, #tpu.memory_space<vmem>>, vector<128x128xbf16>
    %cst_8 = arith.constant dense<0.000000e+00> : vector<8x128xf32>
    %10 = tpu.matmul %8, %9, %cst_8 {dimension_numbers = #tpu.dot_dimension_numbers<[1], [0], [0], [1], [0, 0, 1, 1], [], []>} : vector<8x128xbf16>, vector<128x128xbf16>, vector<8x128xf32> -> vector<8x128xf32>
    %c0_9 = arith.constant 0 : index
    %c0_10 = arith.constant 0 : index
    %11 = vector.load %arg5[%c0_9, %c0_10] : memref<1x128xf32, #tpu.memory_space<vmem>>, vector<1x128xf32>
    %12 = vector.broadcast %11 : vector<1x128xf32> to vector<8x128xf32>
    %13 = arith.addf %10, %12 : vector<8x128xf32>
    %cst_11 = arith.constant 0.000000e+00 : f32
    %14 = vector.broadcast %cst_11 : f32 to vector<8x128xf32>
    %15 = arith.maximumf %13, %14 : vector<8x128xf32>
    %16 = arith.truncf %15 : vector<8x128xf32> to vector<8x128xbf16>
    %c0_12 = arith.constant 0 : index
    %c0_13 = arith.constant 0 : index
    %17 = vector.load %arg6[%c0_12, %c0_13] : memref<128x128xbf16, #tpu.memory_space<vmem>>, vector<128x128xbf16>
    %cst_14 = arith.constant dense<0.000000e+00> : vector<8x128xf32>
    %18 = tpu.matmul %16, %17, %cst_14 {dimension_numbers = #tpu.dot_dimension_numbers<[1], [0], [0], [1], [0, 0, 1, 1], [], []>} : vector<8x128xbf16>, vector<128x128xbf16>, vector<8x128xf32> -> vector<8x128xf32>
    %c0_15 = arith.constant 0 : index
    %c0_16 = arith.constant 0 : index
    %19 = vector.load %arg7[%c0_15, %c0_16] : memref<1x128xf32, #tpu.memory_space<vmem>>, vector<1x128xf32>
    %20 = vector.broadcast %19 : vector<1x128xf32> to vector<8x128xf32>
    %21 = arith.addf %18, %20 : vector<8x128xf32>
    %cst_17 = arith.constant 0.000000e+00 : f32
    %22 = vector.broadcast %cst_17 : f32 to vector<8x128xf32>
    %23 = arith.maximumf %21, %22 : vector<8x128xf32>
    %c0_18 = arith.constant 0 : index
    %c0_19 = arith.constant 0 : index
    %24 = vector.load %arg8[%c0_18, %c0_19] : memref<8x128xf32, #tpu.memory_space<vmem>>, vector<8x128xf32>
    tpu.vector_store %arg8[%c0_18, %c0_19], %23 {strides = array<i32>} : memref<8x128xf32, #tpu.memory_space<vmem>>, vector<8x128xf32>,
    return
  }
  func.func @transform_0(%arg0: i32) -> (i32, i32) {
    %c0_i32 = arith.constant 0 : i32
    %c0_i32_0 = arith.constant 0 : i32
    return %arg0, %c0_i32 : i32, i32
  }
  func.func @transform_1(%arg0: i32) -> (i32, i32) {
    %c0_i32 = arith.constant 0 : i32
    %c0_i32_0 = arith.constant 0 : i32
    %c0_i32_1 = arith.constant 0 : i32
    return %c0_i32, %c0_i32_0 : i32, i32
  }
  func.func @transform_2(%arg0: i32) -> (i32, i32) {
    %c0_i32 = arith.constant 0 : i32
    %c0_i32_0 = arith.constant 0 : i32
    %c0_i32_1 = arith.constant 0 : i32
    return %c0_i32, %c0_i32_0 : i32, i32
  }
  func.func @transform_3(%arg0: i32) -> (i32, i32) {
    %c0_i32 = arith.constant 0 : i32
    %c0_i32_0 = arith.constant 0 : i32
    %c0_i32_1 = arith.constant 0 : i32
    return %c0_i32, %c0_i32_0 : i32, i32
  }
  func.func @transform_4(%arg0: i32) -> (i32, i32) {
    %c0_i32 = arith.constant 0 : i32
    %c0_i32_0 = arith.constant 0 : i32
    %c0_i32_1 = arith.constant 0 : i32
    return %c0_i32, %c0_i32_0 : i32, i32
  }
  func.func @transform_5(%arg0: i32) -> (i32, i32) {
    %c0_i32 = arith.constant 0 : i32
    %c0_i32_0 = arith.constant 0 : i32
    %c0_i32_1 = arith.constant 0 : i32
    return %c0_i32, %c0_i32_0 : i32, i32
  }
  func.func @transform_6(%arg0: i32) -> (i32, i32) {
    %c0_i32 = arith.constant 0 : i32
    %c0_i32_0 = arith.constant 0 : i32
    %c0_i32_1 = arith.constant 0 : i32
    return %c0_i32, %c0_i32_0 : i32, i32
  }
  func.func @transform_7(%arg0: i32) -> (i32, i32) {
    %c0_i32 = arith.constant 0 : i32
    %c0_i32_0 = arith.constant 0 : i32
    return %arg0, %c0_i32 : i32, i32
  }
}

</mosaic_0001>

<llo_original>
// kernel: fc_relu.1
$region0: #{fc_relu.1}
  #allocation0 [shape = 'u32[]', space=smem, size = 0x4, offset = 0x4, fixed_abs, tag = 'smem constant byte address 0x4 - core index']
  #allocation1 [shape = 'u32[144,128]{1,0:T(1,128)}', space=vmem, size = 0x12000, scoped, tag = 'internal scratch']
  %s0 = inlined_call_operand.vmem [shape: bf16[8,128], index: 0, kind: input, shape index: {}]
  %s1 = inlined_call_operand.hbm [shape: bf16[128,128], index: 1, kind: input, shape index: {}]
  %s2 = inlined_call_operand.vmem [shape: f32[1,128], index: 2, kind: input, shape index: {}]
  %s3 = inlined_call_operand.hbm [shape: bf16[128,128], index: 3, kind: input, shape index: {}]
  %s4 = inlined_call_operand.vmem [shape: f32[1,128], index: 4, kind: input, shape index: {}]
  %s5 = inlined_call_operand.hbm [shape: bf16[128,128], index: 5, kind: input, shape index: {}]
  %s6 = inlined_call_operand.vmem [shape: f32[1,128], index: 6, kind: input, shape index: {}]
  %s7 = inlined_call_operand.hbm [shape: f32[8,128], index: 7, kind: output, shape index: {}]
  %s8 = sld [smem:[#allocation0]]
  $region50: #{fc_relu.1} parent=0
    _
  %s10 = ssub.s32 1, %s8
  %s11 = scalar_select 0, %s10, %s8
  $region1: #{fc_relu.1} parent=0
    #allocation2 [shape = 'u8[32768]{0}', space=vmem, size = 0x8000, scoped, tag = 'input window, operand 1, single buffered']
    #allocation3 [shape = 's32[1]{0}', space=sflag, size = 0x4, scoped, tag = 'scoped memory for fc_relu.1']
    #allocation4 [shape = 's32[1]{0}', space=sflag, size = 0x4, scoped, tag = 'scoped memory for fc_relu.1']
    #allocation5 [shape = 'u8[32768]{0}', space=vmem, size = 0x8000, scoped, tag = 'input window, operand 3, single buffered']
    #allocation6 [shape = 's32[1]{0}', space=sflag, size = 0x4, scoped, tag = 'scoped memory for fc_relu.1']
    #allocation7 [shape = 'u8[32768]{0}', space=vmem, size = 0x8000, scoped, tag = 'input window, operand 5, single buffered']
    #allocation8 [shape = 'u8[4096]{0}', space=vmem, size = 0x1000, scoped, tag = 'output window, operand 0, single buffered']
    %12 = vsyncpa [#allocation3], 0
    %13 = vsyncpa [#allocation6], 0
    %14 = vsyncpa [#allocation4], 0
    // Predicated region
    $region2: #{fc_relu.1} parent=1 // pred_check
      _
    $region3: #{fc_relu.1} parent=1 // pred_check_branch
      %16 = sbr.rel (0) target = $region5
    $region4: #{fc_relu.1} parent=1 // pred_region
      _
    $region5: #{fc_relu.1} parent=1 // pred_fallthru
      _
    // Predicated region
    $region6: #{fc_relu.1} parent=1 // pred_check
      _
    $region7: #{fc_relu.1} parent=1 // pred_check_branch
      %18 = sbr.rel (0) target = $region9
    $region8: #{fc_relu.1} parent=1 // pred_region
      %s20 = ssub.s32 1024, 1024
      %21 = vsyncadd [#allocation3], %s20
      %s22 = sshll.u32 [#allocation2], 4
      %s23 = int_to_ptr.vmem [resolvable:$true] %s22
      %28 = dma.hbm_to_vmem [thread:$0]  %s1, 1024, %s23, [#allocation3], 64, 64, 4
    $region9: #{fc_relu.1} parent=1 // pred_fallthru
      _
    // Predicated region
    $region10: #{fc_relu.1} parent=1 // pred_check
      _
    $region11: #{fc_relu.1} parent=1 // pred_check_branch
      %30 = sbr.rel (0) target = $region13
    $region12: #{fc_relu.1} parent=1 // pred_region
      _
    $region13: #{fc_relu.1} parent=1 // pred_fallthru
      _
    // Predicated region
    $region14: #{fc_relu.1} parent=1 // pred_check
      _
    $region15: #{fc_relu.1} parent=1 // pred_check_branch
      %32 = sbr.rel (0) target = $region17
    $region16: #{fc_relu.1} parent=1 // pred_region
      %s34 = ssub.s32 1024, 1024
      %35 = vsyncadd [#allocation6], %s34
      %s36 = sshll.u32 [#allocation5], 4
      %s37 = int_to_ptr.vmem [resolvable:$true] %s36
      %42 = dma.hbm_to_vmem [thread:$0]  %s3, 1024, %s37, [#allocation6], 64, 64, 4
    $region17: #{fc_relu.1} parent=1 // pred_fallthru
      _
    // Predicated region
    $region18: #{fc_relu.1} parent=1 // pred_check
      _
    $region19: #{fc_relu.1} parent=1 // pred_check_branch
      %44 = sbr.rel (0) target = $region21
    $region20: #{fc_relu.1} parent=1 // pred_region
      _
    $region21: #{fc_relu.1} parent=1 // pred_fallthru
      _
    // Predicated region
    $region22: #{fc_relu.1} parent=1 // pred_check
      _
    $region23: #{fc_relu.1} parent=1 // pred_check_branch
      %46 = sbr.rel (0) target = $region25
    $region24: #{fc_relu.1} parent=1 // pred_region
      %s48 = ssub.s32 1024, 1024
      %49 = vsyncadd [#allocation6], %s48
      %s50 = sshll.u32 [#allocation7], 4
      %s51 = int_to_ptr.vmem [resolvable:$true] %s50
      %56 = dma.hbm_to_vmem [thread:$0]  %s5, 1024, %s51, [#allocation6], 64, 64, 4
    $region25: #{fc_relu.1} parent=1 // pred_fallthru
      _
    // Predicated region
    $region26: #{fc_relu.1} parent=1 // pred_check
      _
    $region27: #{fc_relu.1} parent=1 // pred_check_branch
      %58 = sbr.rel (0) target = $region29
    $region28: #{fc_relu.1} parent=1 // pred_region
      _
    $region29: #{fc_relu.1} parent=1 // pred_fallthru
      _
    // Predicated region
    $region30: #{fc_relu.1} parent=1 // pred_check
      _
    $region31: #{fc_relu.1} parent=1 // pred_check_branch
      %60 = sbr.rel (0) target = $region33
    $region32: #{fc_relu.1} parent=1 // pred_region
      %61 = dma.done [#allocation3], 1024
    $region33: #{fc_relu.1} parent=1 // pred_fallthru
      _
    // Predicated region
    $region34: #{fc_relu.1} parent=1 // pred_check
      _
    $region35: #{fc_relu.1} parent=1 // pred_check_branch
      %63 = sbr.rel (0) target = $region37
    $region36: #{fc_relu.1} parent=1 // pred_region
      %64 = dma.done [#allocation6], 1024
    $region37: #{fc_relu.1} parent=1 // pred_fallthru
      _
    // Predicated region
    $region38: #{fc_relu.1} parent=1 // pred_check
      _
    $region39: #{fc_relu.1} parent=1 // pred_check_branch
      %66 = sbr.rel (0) target = $region41
    $region40: #{fc_relu.1} parent=1 // pred_region
      %67 = dma.done [#allocation6], 1024
    $region41: #{fc_relu.1} parent=1 // pred_fallthru
      _
    %v69 = vld [vmem:[%s0] sm:$0xf]
    %v70 = vld [vmem:[#allocation2] sm:$0xf]
    %v71 = vld [vmem:[#allocation2 + $0x4] sm:$0xf]
    %v72 = vld [vmem:[#allocation2 + $0x8] sm:$0xf]
    %v73 = vld [vmem:[#allocation2 + $0xc] sm:$0xf]
    %v74 = vld [vmem:[#allocation2 + $0x10] sm:$0xf]
    %v75 = vld [vmem:[#allocation2 + $0x14] sm:$0xf]
    %v76 = vld [vmem:[#allocation2 + $0x18] sm:$0xf]
    %v77 = vld [vmem:[#allocation2 + $0x1c] sm:$0xf]
    %v78 = vld [vmem:[#allocation2 + $0x20] sm:$0xf]
    %v79 = vld [vmem:[#allocation2 + $0x24] sm:$0xf]
    %v80 = vld [vmem:[#allocation2 + $0x28] sm:$0xf]
    %v81 = vld [vmem:[#allocation2 + $0x2c] sm:$0xf]
    %v82 = vld [vmem:[#allocation2 + $0x30] sm:$0xf]
    %v83 = vld [vmem:[#allocation2 + $0x34] sm:$0xf]
    %v84 = vld [vmem:[#allocation2 + $0x38] sm:$0xf]
    %v85 = vld [vmem:[#allocation2 + $0x3c] sm:$0xf]
    %v86 = vld [vmem:[%s2] sm:$0x1]
    %v88 = vlaneseq
    %v89 = vshrl.u32 %v88, 7
    %v90 = vsub.s32 0, %v89
    %v91 = vrot.slane %v86, %v90
    %v109 = vunpack.c.l.b16 %v70
    %v110 = vunpack.c.l.b16 %v71
    %v111 = vunpack.c.l.b16 %v72
    %v112 = vunpack.c.l.b16 %v73
    %v113 = vunpack.c.l.b16 %v74
    %v114 = vunpack.c.l.b16 %v75
    %v115 = vunpack.c.l.b16 %v76
    %v116 = vunpack.c.l.b16 %v77
    %v117 = vunpack.c.l.b16 %v78
    %v118 = vunpack.c.l.b16 %v79
    %v119 = vunpack.c.l.b16 %v80
    %v120 = vunpack.c.l.b16 %v81
    %v121 = vunpack.c.l.b16 %v82
    %v122 = vunpack.c.l.b16 %v83
    %v123 = vunpack.c.l.b16 %v84
    %v124 = vunpack.c.l.b16 %v85
    %v125 = vpack.c.b16 %v110, %v109
    %v126 = vpack.c.b16 %v112, %v111
    %v127 = vpack.c.b16 %v114, %v113
    %v128 = vpack.c.b16 %v116, %v115
    %v129 = vpack.c.b16 %v118, %v117
    %v130 = vpack.c.b16 %v120, %v119
    %v131 = vpack.c.b16 %v122, %v121
    %v132 = vpack.c.b16 %v124, %v123
    %141 = vmatprep.subr.bf16.mxu0 0
    %142 = vmatpush1.bf16.msra.mxu0 %v125
    %143 = vmatprep.subr.bf16.mxu0 0
    %144 = vmatpush1.bf16.msra.mxu0 %v126
    %145 = vmatprep.subr.bf16.mxu0 0
    %146 = vmatpush1.bf16.msra.mxu0 %v127
    %147 = vmatprep.subr.bf16.mxu0 0
    %148 = vmatpush1.bf16.msra.mxu0 %v128
    %149 = vmatprep.subr.bf16.mxu0 0
    %150 = vmatpush1.bf16.msra.mxu0 %v129
    %151 = vmatprep.subr.bf16.mxu0 0
    %152 = vmatpush1.bf16.msra.mxu0 %v130
    %153 = vmatprep.subr.bf16.mxu0 0
    %154 = vmatpush1.bf16.msra.mxu0 %v131
    %155 = vmatprep.subr.bf16.mxu0 0
    %156 = vmatpush1.bf16.msra.mxu0 %v132
    %157 = vmatprep.subr.bf16.mxu0 0
    %158 = vmatpush1.bf16.msra.mxu0 0
    %159 = vmatprep.subr.bf16.mxu0 0
    %160 = vmatpush1.bf16.msra.mxu0 0
    %161 = vmatprep.subr.bf16.mxu0 0
    %162 = vmatpush1.bf16.msra.mxu0 0
    %163 = vmatprep.subr.bf16.mxu0 0
    %164 = vmatpush1.bf16.msra.mxu0 0
    %165 = vmatprep.subr.bf16.mxu0 0
    %166 = vmatpush1.bf16.msra.mxu0 0
    %167 = vmatprep.subr.bf16.mxu0 0
    %168 = vmatpush1.bf16.msra.mxu0 0
    %169 = vmatprep.subr.bf16.mxu0 0
    %170 = vmatpush1.bf16.msra.mxu0 0
    %171 = vmatprep.subr.bf16.mxu0 0
    %172 = vmatpush1.bf16.msra.mxu0 0
    %173 = vmatprep.mubr.bf16.mxu0 0
    %174 = vmatmul.mubr.bf16.gmra.mrb[0].mxu0 %v69
    %v175 = vpop.f32.mrb[0].mxu0
    %v176 = vadd.f32 %v91, %v175
    %v177 = vpop.f32.mrb[0].mxu0
    %v178 = vpop.f32.mrb[0].mxu0
    %v179 = vpop.f32.mrb[0].mxu0
    %180 = vdwg.mxu0
    %v181 = vmax.f32 %v176, 0.0
    %v182 = vpack.c.bf16 %v181, %v181
    %v183 = vld [vmem:[#allocation5] sm:$0xf]
    %v184 = vld [vmem:[#allocation5 + $0x4] sm:$0xf]
    %v185 = vld [vmem:[#allocation5 + $0x8] sm:$0xf]
    %v186 = vld [vmem:[#allocation5 + $0xc] sm:$0xf]
    %v187 = vld [vmem:[#allocation5 + $0x10] sm:$0xf]
    %v188 = vld [vmem:[#allocation5 + $0x14] sm:$0xf]
    %v189 = vld [vmem:[#allocation5 + $0x18] sm:$0xf]
    %v190 = vld [vmem:[#allocation5 + $0x1c] sm:$0xf]
    %v191 = vld [vmem:[#allocation5 + $0x20] sm:$0xf]
    %v192 = vld [vmem:[#allocation5 + $0x24] sm:$0xf]
    %v193 = vld [vmem:[#allocation5 + $0x28] sm:$0xf]
    %v194 = vld [vmem:[#allocation5 + $0x2c] sm:$0xf]
    %v195 = vld [vmem:[#allocation5 + $0x30] sm:$0xf]
    %v196 = vld [vmem:[#allocation5 + $0x34] sm:$0xf]
    %v197 = vld [vmem:[#allocation5 + $0x38] sm:$0xf]
    %v198 = vld [vmem:[#allocation5 + $0x3c] sm:$0xf]
    %v199 = vld [vmem:[%s4] sm:$0x1]
    %v201 = vlaneseq
    %v202 = vshrl.u32 %v201, 7
    %v203 = vsub.s32 0, %v202
    %v204 = vrot.slane %v199, %v203
    %v222 = vunpack.c.l.b16 %v183
    %v223 = vunpack.c.l.b16 %v184
    %v224 = vunpack.c.l.b16 %v185
    %v225 = vunpack.c.l.b16 %v186
    %v226 = vunpack.c.l.b16 %v187
    %v227 = vunpack.c.l.b16 %v188
    %v228 = vunpack.c.l.b16 %v189
    %v229 = vunpack.c.l.b16 %v190
    %v230 = vunpack.c.l.b16 %v191
    %v231 = vunpack.c.l.b16 %v192
    %v232 = vunpack.c.l.b16 %v193
    %v233 = vunpack.c.l.b16 %v194
    %v234 = vunpack.c.l.b16 %v195
    %v235 = vunpack.c.l.b16 %v196
    %v236 = vunpack.c.l.b16 %v197
    %v237 = vunpack.c.l.b16 %v198
    %v238 = vpack.c.b16 %v223, %v222
    %v239 = vpack.c.b16 %v225, %v224
    %v240 = vpack.c.b16 %v227, %v226
    %v241 = vpack.c.b16 %v229, %v228
    %v242 = vpack.c.b16 %v231, %v230
    %v243 = vpack.c.b16 %v233, %v232
    %v244 = vpack.c.b16 %v235, %v234
    %v245 = vpack.c.b16 %v237, %v236
    %254 = vmatprep.subr.bf16.mxu0 0
    %255 = vmatpush1.bf16.msra.mxu0 %v238
    %256 = vmatprep.subr.bf16.mxu0 0
    %257 = vmatpush1.bf16.msra.mxu0 %v239
    %258 = vmatprep.subr.bf16.mxu0 0
    %259 = vmatpush1.bf16.msra.mxu0 %v240
    %260 = vmatprep.subr.bf16.mxu0 0
    %261 = vmatpush1.bf16.msra.mxu0 %v241
    %262 = vmatprep.subr.bf16.mxu0 0
    %263 = vmatpush1.bf16.msra.mxu0 %v242
    %264 = vmatprep.subr.bf16.mxu0 0
    %265 = vmatpush1.bf16.msra.mxu0 %v243
    %266 = vmatprep.subr.bf16.mxu0 0
    %267 = vmatpush1.bf16.msra.mxu0 %v244
    %268 = vmatprep.subr.bf16.mxu0 0
    %269 = vmatpush1.bf16.msra.mxu0 %v245
    %270 = vmatprep.subr.bf16.mxu0 0
    %271 = vmatpush1.bf16.msra.mxu0 0
    %272 = vmatprep.subr.bf16.mxu0 0
    %273 = vmatpush1.bf16.msra.mxu0 0
    %274 = vmatprep.subr.bf16.mxu0 0
    %275 = vmatpush1.bf16.msra.mxu0 0
    %276 = vmatprep.subr.bf16.mxu0 0
    %277 = vmatpush1.bf16.msra.mxu0 0
    %278 = vmatprep.subr.bf16.mxu0 0
    %279 = vmatpush1.bf16.msra.mxu0 0
    %280 = vmatprep.subr.bf16.mxu0 0
    %281 = vmatpush1.bf16.msra.mxu0 0
    %282 = vmatprep.subr.bf16.mxu0 0
    %283 = vmatpush1.bf16.msra.mxu0 0
    %284 = vmatprep.subr.bf16.mxu0 0
    %285 = vmatpush1.bf16.msra.mxu0 0
    %286 = vmatprep.mubr.bf16.mxu0 0
    %287 = vmatmul.mubr.bf16.gmra.mrb[0].mxu0 %v182
    %v288 = vpop.f32.mrb[0].mxu0
    %v289 = vadd.f32 %v204, %v288
    %v290 = vpop.f32.mrb[0].mxu0
    %v291 = vpop.f32.mrb[0].mxu0
    %v292 = vpop.f32.mrb[0].mxu0
    %293 = vdwg.mxu0
    %v294 = vmax.f32 %v289, 0.0
    %v295 = vpack.c.bf16 %v294, %v294
    %v296 = vld [vmem:[#allocation7] sm:$0xf]
    %v297 = vld [vmem:[#allocation7 + $0x4] sm:$0xf]
    %v298 = vld [vmem:[#allocation7 + $0x8] sm:$0xf]
    %v299 = vld [vmem:[#allocation7 + $0xc] sm:$0xf]
    %v300 = vld [vmem:[#allocation7 + $0x10] sm:$0xf]
    %v301 = vld [vmem:[#allocation7 + $0x14] sm:$0xf]
    %v302 = vld [vmem:[#allocation7 + $0x18] sm:$0xf]
    %v303 = vld [vmem:[#allocation7 + $0x1c] sm:$0xf]
    %v304 = vld [vmem:[#allocation7 + $0x20] sm:$0xf]
    %v305 = vld [vmem:[#allocation7 + $0x24] sm:$0xf]
    %v306 = vld [vmem:[#allocation7 + $0x28] sm:$0xf]
    %v307 = vld [vmem:[#allocation7 + $0x2c] sm:$0xf]
    %v308 = vld [vmem:[#allocation7 + $0x30] sm:$0xf]
    %v309 = vld [vmem:[#allocation7 + $0x34] sm:$0xf]
    %v310 = vld [vmem:[#allocation7 + $0x38] sm:$0xf]
    %v311 = vld [vmem:[#allocation7 + $0x3c] sm:$0xf]
    %v312 = vld [vmem:[%s6] sm:$0x1]
    %v314 = vlaneseq
    %v315 = vshrl.u32 %v314, 7
    %v316 = vsub.s32 0, %v315
    %v317 = vrot.slane %v312, %v316
    %v335 = vunpack.c.l.b16 %v296
    %v336 = vunpack.c.l.b16 %v297
    %v337 = vunpack.c.l.b16 %v298
    %v338 = vunpack.c.l.b16 %v299
    %v339 = vunpack.c.l.b16 %v300
    %v340 = vunpack.c.l.b16 %v301
    %v341 = vunpack.c.l.b16 %v302
    %v342 = vunpack.c.l.b16 %v303
    %v343 = vunpack.c.l.b16 %v304
    %v344 = vunpack.c.l.b16 %v305
    %v345 = vunpack.c.l.b16 %v306
    %v346 = vunpack.c.l.b16 %v307
    %v347 = vunpack.c.l.b16 %v308
    %v348 = vunpack.c.l.b16 %v309
    %v349 = vunpack.c.l.b16 %v310
    %v350 = vunpack.c.l.b16 %v311
    %v351 = vpack.c.b16 %v336, %v335
    %v352 = vpack.c.b16 %v338, %v337
    %v353 = vpack.c.b16 %v340, %v339
    %v354 = vpack.c.b16 %v342, %v341
    %v355 = vpack.c.b16 %v344, %v343
    %v356 = vpack.c.b16 %v346, %v345
    %v357 = vpack.c.b16 %v348, %v347
    %v358 = vpack.c.b16 %v350, %v349
    %367 = vmatprep.subr.bf16.mxu0 0
    %368 = vmatpush1.bf16.msra.mxu0 %v351
    %369 = vmatprep.subr.bf16.mxu0 0
    %370 = vmatpush1.bf16.msra.mxu0 %v352
    %371 = vmatprep.subr.bf16.mxu0 0
    %372 = vmatpush1.bf16.msra.mxu0 %v353
    %373 = vmatprep.subr.bf16.mxu0 0
    %374 = vmatpush1.bf16.msra.mxu0 %v354
    %375 = vmatprep.subr.bf16.mxu0 0
    %376 = vmatpush1.bf16.msra.mxu0 %v355
    %377 = vmatprep.subr.bf16.mxu0 0
    %378 = vmatpush1.bf16.msra.mxu0 %v356
    %379 = vmatprep.subr.bf16.mxu0 0
    %380 = vmatpush1.bf16.msra.mxu0 %v357
    %381 = vmatprep.subr.bf16.mxu0 0
    %382 = vmatpush1.bf16.msra.mxu0 %v358
    %383 = vmatprep.subr.bf16.mxu0 0
    %384 = vmatpush1.bf16.msra.mxu0 0
    %385 = vmatprep.subr.bf16.mxu0 0
    %386 = vmatpush1.bf16.msra.mxu0 0
    %387 = vmatprep.subr.bf16.mxu0 0
    %388 = vmatpush1.bf16.msra.mxu0 0
    %389 = vmatprep.subr.bf16.mxu0 0
    %390 = vmatpush1.bf16.msra.mxu0 0
    %391 = vmatprep.subr.bf16.mxu0 0
    %392 = vmatpush1.bf16.msra.mxu0 0
    %393 = vmatprep.subr.bf16.mxu0 0
    %394 = vmatpush1.bf16.msra.mxu0 0
    %395 = vmatprep.subr.bf16.mxu0 0
    %396 = vmatpush1.bf16.msra.mxu0 0
    %397 = vmatprep.subr.bf16.mxu0 0
    %398 = vmatpush1.bf16.msra.mxu0 0
    %399 = vmatprep.mubr.bf16.mxu0 0
    %400 = vmatmul.mubr.bf16.gmra.mrb[0].mxu0 %v295
    %v401 = vpop.f32.mrb[0].mxu0
    %v402 = vadd.f32 %v317, %v401
    %v403 = vpop.f32.mrb[0].mxu0
    %v404 = vpop.f32.mrb[0].mxu0
    %v405 = vpop.f32.mrb[0].mxu0
    %406 = vdwg.mxu0
    %v407 = vmax.f32 %v402, 0.0
    %408 = vst [vmem:[#allocation8] sm:$0xff] %v407
    // Predicated region
    $region42: #{fc_relu.1} parent=1 // pred_check
      _
    $region43: #{fc_relu.1} parent=1 // pred_check_branch
      %410 = sbr.rel (0) target = $region45
    $region44: #{fc_relu.1} parent=1 // pred_region
      %s412 = ssub.s32 128, 128
      %413 = vsyncadd [#allocation4], %s412
      %s415 = sshll.u32 [#allocation8], 4
      %s416 = int_to_ptr.vmem [resolvable:$true] %s415
      %418 = dma.vmem_to_hbm [thread:$0]  %s416, 128, %s7, [#allocation4]
    $region45: #{fc_relu.1} parent=1 // pred_fallthru
      _
    // Predicated region
    $region46: #{fc_relu.1} parent=1 // pred_check
      _
    $region47: #{fc_relu.1} parent=1 // pred_check_branch
      %420 = sbr.rel (0) target = $region49
    $region48: #{fc_relu.1} parent=1 // pred_region
      %421 = dma.done [#allocation4], 128
    $region49: #{fc_relu.1} parent=1 // pred_fallthru
      _
    %422 = vsyncpa [#allocation3], 1
    %423 = vsyncpa [#allocation6], 1
    %424 = vsyncpa [#allocation4], 1

</llo_original>
